<compile_context>
chip_gen: v7x
topology: tpu7x:2x2x1
jax: 0.10.0
libtpu: 0.0.40
codegen_flags: <defaults>
</compile_context>

<pallas_src>
import math

import numpy as np
import jax
import jax.numpy as jnp
from jax.experimental import pallas as pl
from jax.experimental.pallas import tpu as pltpu


def _pair(v):
    return tuple(v) if isinstance(v, (tuple, list)) else (v, v)


def _ceil_div(a, b):
    return -(-a // b)


def _out_size(size, k, s, d, p, ceil_mode):
    """PyTorch MaxPool2d output-size rule for one spatial dim."""
    eff_k = d * (k - 1) + 1
    num = size + 2 * p - eff_k
    if ceil_mode:
        out = _ceil_div(num, s) + 1
        # last window must start inside the input or left padding
        if (out - 1) * s >= size + p:
            out -= 1
    else:
        out = num // s + 1
    return out


def _vmem_capacity_bytes():
    """Physical VMEM per TensorCore; conservative fallback if unqueryable."""
    try:
        info = pltpu.get_tpu_info()
        for name in ("vmem_capacity_bytes", "vmem_size_bytes", "vmem_bytes"):
            val = getattr(info, name, None)
            if val:
                return int(val)
    except Exception:
        pass
    return 64 * 1024 * 1024      # v7x per-core VMEM (smallest current chip)


def _pick_bc(nc, budget_bytes, per_bc_bytes, hard_cap):
    """Largest divisor of nc fitting the VMEM budget; prefer an even number
    of grid steps (>=2) so the parallel axis splits across v7x's 2 cores."""
    cap = max(1, min(nc, hard_cap, budget_bytes // max(1, per_bc_bytes)))
    divs = [d for d in range(1, nc + 1) if nc % d == 0 and d <= cap]
    even = [d for d in divs if (nc // d) >= 2 and (nc // d) % 2 == 0]
    ge2 = [d for d in divs if (nc // d) >= 2]
    for cand in (even, ge2, divs):
        if cand:
            return max(cand)
    return 1


def _make_pool_kernel(*, BC, H, W, Ho, Wo, kH, kW, sH, sW, dH, dW,
                      pt, pL, Hp, Wp, Hs, Wc, Dw, H_eff, spanW,
                      pad_val, neg_val, dtype, mat_dtype,
                      use_canvas, use_sel, batched_mm):

    def _rows(kh):
        start = kh * dH
        if sH == 1:
            return pl.ds(start, Ho)
        return pl.ds(start, Ho, sH)

    def kernel(*refs):
        if use_sel:
            x_ref, sel_ref, o_ref = refs[:3]
            scratch = refs[3:]
        else:
            x_ref, o_ref = refs[:2]
            scratch = refs[2:]

        if use_canvas:
            canvas = scratch[0]

            def fill(r0, r1, c0, c1, val):
                # Static (trace-time) extents; emit nothing for empty strips.
                if r1 > r0 and c1 > c0:
                    canvas[:, r0:r1, c0:c1] = jnp.full(
                        (BC, r1 - r0, c1 - c0), val, dtype)

            ir0, ir1 = pt, pt + H_eff            # rows overwritten from x_ref
            ic0, ic1 = Dw + pL, Dw + pL + W      # cols overwritten from x_ref
            hpad_end = min(Hp, Hs)               # end of explicit bottom pad
            wpad_end = min(Dw + Wp, Wc)          # end of explicit right pad
            # -- explicit padding (participates in the max for 'same') --
            fill(0, min(pt, Hs), Dw, Wc, pad_val)        # top pad rows
            fill(ir1, hpad_end, Dw, Wc, pad_val)         # bottom pad rows
            fill(ir0, ir1, Dw, ic0, pad_val)             # left pad cols
            fill(ir0, ir1, ic1, wpad_end, pad_val)       # right pad cols
            # -- ceil_mode overhang: outside the padded frame, never wins --
            fill(hpad_end, Hs, Dw, Wc, neg_val)
            fill(0, Hs, wpad_end, Wc, neg_val)
            if H_eff > 0:
                canvas[:, ir0:ir1, ic0:ic1] = x_ref[:, 0:H_eff, :]
            src = canvas
        else:
            src = x_ref

        # ---- kH taps: strided sublane reads, running max --------------------
        colred = src[:, _rows(0), :]
        for kh in range(1, kH):
            colred = jnp.maximum(colred, src[:, _rows(kh), :])

        # ---- kW taps: contiguous lane slices, running max -------------------
        rowred = colred[:, :, Dw:Dw + spanW]
        for kw in range(1, kW):
            start = Dw + kw * dW
            rowred = jnp.maximum(rowred, colred[:, :, start:start + spanW])
        # rowred[..., w'] = window max anchored at padded column w';
        # the output needs w' = ow * sW.

        # ---- stride-sW lane subsample ---------------------------------------
        if sW == 1:
            o_ref[...] = rowred.astype(o_ref.dtype)
            return

        # One-hot selection matmul on the otherwise idle MXU (avoids
        # lane-strided vector loads).  sel is a host-precomputed constant in
        # the native float dtype; selection with 0/1 weights is exact under
        # f32 accumulation.
        sel = sel_ref[...]
        rm = rowred.astype(mat_dtype)
        if batched_mm:
            # Ho % 8 == 0 -> merging (BC, Ho, spanW) -> (BC*Ho, spanW) is
            # sublane-tile preserving; one MXU call covers the whole block.
            res = jnp.dot(rm.reshape(BC * Ho, spanW), sel,
                          preferred_element_type=jnp.float32)
            o_ref[...] = res.reshape(BC, Ho, Wo).astype(o_ref.dtype)
        else:
            # Fallback (Ho not a sublane multiple): per-image matmuls.
            for bc in range(BC):
                res = jnp.dot(rm[bc], sel, preferred_element_type=jnp.float32)
                o_ref[bc] = res.astype(o_ref.dtype)

    return kernel


def custom_max_pool2d(x_nchw, kernel_size, stride=None, padding=0,
                      dilation=1, ceil_mode=False):
    """Forward pass of CustomMaxPool2d.  Input/output are NCHW."""
    kH, kW = _pair(kernel_size)
    sH, sW = _pair(stride) if stride is not None else (kH, kW)
    dH, dW = _pair(dilation)
    N, C, H, W = x_nchw.shape
    dtype = x_nchw.dtype
    is_float = jnp.issubdtype(dtype, jnp.floating)

    if is_float:
        neg_val = float(jnp.finfo(dtype).min)
    else:
        # TODO(synk): integer inputs with sW > 1 go through an f32 one-hot
        # matmul and may lose exactness for |x| >= 2**24.
        neg_val = int(jnp.iinfo(dtype).min)

    if padding == "same":
        Ho0 = math.ceil(H / sH)
        Wo0 = math.ceil(W / sW)
        pad_h = max((Ho0 - 1) * sH + kH - H, 0)
        pad_w = max((Wo0 - 1) * sW + kW - W, 0)
        pt, pb = pad_h // 2, pad_h - pad_h // 2
        pL, pR = pad_w // 2, pad_w - pad_w // 2
        pad_val = 0.0 if is_float else 0       # 'same' pad participates in max
        Ho = _out_size(H + pad_h, kH, sH, dH, 0, ceil_mode)
        Wo = _out_size(W + pad_w, kW, sW, dW, 0, ceil_mode)
    else:
        pH, pW = _pair(padding)
        pt = pb = pH
        pL = pR = pW
        pad_val = neg_val            # MaxPool2d padding never wins the max
        Ho = _out_size(H, kH, sH, dH, pH, ceil_mode)
        Wo = _out_size(W, kW, sW, dW, pW, ceil_mode)

    assert Ho > 0 and Wo > 0, "degenerate pooling configuration"

    spanW = (Wo - 1) * sW + 1                  # fine-resolution columns needed
    Wp_need = (kW - 1) * dW + spanW            # padded columns touched
    Hs = (kH - 1) * dH + (Ho - 1) * sH + 1     # padded rows touched
    Hp = pt + H + pb                           # explicitly padded extents
    Wp = pL + W + pR

    use_canvas = (pt > 0) or (pL > 0) or (Hs > H) or (Wp_need > W)
    # keep the feature map lane-aligned inside the canvas (left pad rounded up)
    Dw = 0 if pL == 0 else ((pL + 127) // 128) * 128 - pL
    Wc = Dw + max(pL + W, Wp_need) if use_canvas else W
    H_eff = max(0, min(H, Hs - pt))

    use_sel = sW > 1
    mat_dtype = dtype if is_float else jnp.float32
    batched_mm = use_sel and (Ho % 8 == 0)

    NC = N * C
    itemsize = jnp.dtype(dtype).itemsize
    src_w = Wc if use_canvas else W
    # Per-image VMEM footprint: double-buffered input & output blocks, the
    # canvas scratch, and the colred/rowred temporaries (+ f32 matmul result).
    per_bc = itemsize * (2 * H * W + 2 * Ho * Wo
                         + (Hs * Wc if use_canvas else 0)
                         + 2 * Ho * src_w)
    if use_sel:
        per_bc += 4 * Ho * Wo
    # cap the per-image unroll of the fallback matmul path (code size / trace)
    hard_cap = 256 if (batched_mm or not use_sel) else 32

    vmem_cap = _vmem_capacity_bytes()
    block_budget = min(24 * 1024 * 1024, int(0.30 * vmem_cap))
    BC = _pick_bc(NC, block_budget, per_bc, hard_cap)

    sel_bytes = jnp.dtype(mat_dtype).itemsize * spanW * Wo if use_sel else 0
    est = BC * per_bc + 2 * sel_bytes + (1 << 20)
    vmem_limit = int(min(int(0.85 * vmem_cap),
                         max(32 * 1024 * 1024, 2 * est)))

    kernel = _make_pool_kernel(
        BC=BC, H=H, W=W, Ho=Ho, Wo=Wo, kH=kH, kW=kW, sH=sH, sW=sW,
        dH=dH, dW=dW, pt=pt, pL=pL, Hp=Hp, Wp=Wp, Hs=Hs, Wc=Wc, Dw=Dw,
        H_eff=H_eff, spanW=spanW, pad_val=pad_val, neg_val=neg_val,
        dtype=dtype, mat_dtype=mat_dtype, use_canvas=use_canvas,
        use_sel=use_sel, batched_mm=batched_mm)

    x3 = jnp.reshape(x_nchw, (NC, H, W))       # free: NCHW is already (NC,H,W)
    inputs = [x3]
    in_specs = [pl.BlockSpec((BC, H, W), lambda i: (i, 0, 0))]
    if use_sel:
        # Host-precomputed one-hot selection matrix (tiny, constant operand).
        sel = (jnp.arange(spanW, dtype=jnp.int32)[:, None] ==
               (jnp.arange(Wo, dtype=jnp.int32) * sW)[None, :]).astype(mat_dtype)
        inputs.append(sel)
        in_specs.append(pl.BlockSpec((spanW, Wo), lambda i: (0, 0)))

    scratch_shapes = [pltpu.VMEM((BC, Hs, Wc), dtype)] if use_canvas else []

    out3 = pl.pallas_call(
        kernel,
        out_shape=jax.ShapeDtypeStruct((NC, Ho, Wo), dtype),
        grid=(NC // BC,),
        in_specs=in_specs,
        out_specs=pl.BlockSpec((BC, Ho, Wo), lambda i: (i, 0, 0)),
        scratch_shapes=scratch_shapes,
        compiler_params=pltpu.CompilerParams(
            dimension_semantics=("parallel",),
            vmem_limit_bytes=vmem_limit),
    )(*inputs)
    return jnp.reshape(out3, (N, C, Ho, Wo))


# ---------------- plain-numpy reference (verification only) -----------------
def _ref_max_pool(x_nchw, k, s, padding, ceil_mode=False):
    x = np.asarray(x_nchw)
    N, C, H, W = x.shape
    kH, kW = _pair(k)
    sH, sW = _pair(s)
    if padding == "same":
        Ho = math.ceil(H / sH)
        Wo = math.ceil(W / sW)
        ph = max((Ho - 1) * sH + kH - H, 0)
        pw = max((Wo - 1) * sW + kW - W, 0)
        xp = np.pad(x, ((0, 0), (0, 0),
                        (ph // 2, ph - ph // 2),
                        (pw // 2, pw - pw // 2)),
                    constant_values=0.0)
        Ho = _out_size(H + ph, kH, sH, 1, 0, ceil_mode)
        Wo = _out_size(W + pw, kW, sW, 1, 0, ceil_mode)
    else:
        pH, pW = _pair(padding)
        xp = np.pad(x, ((0, 0), (0, 0), (pH, pH), (pW, pW)),
                    constant_values=-np.inf)
        Ho = _out_size(H, kH, sH, 1, pH, ceil_mode)
        Wo = _out_size(W, kW, sW, 1, pW, ceil_mode)
    out = np.full((N, C, Ho, Wo), -np.inf, dtype=np.float64)
    for i in range(Ho):
        for j in range(Wo):
            win = xp[:, :, i * sH:i * sH + kH, j * sW:j * sW + kW]
            out[:, :, i, j] = win.max(axis=(2, 3))
    return out.astype(x.dtype)


if __name__ == "__main__":
    key = jax.random.PRNGKey(0)
    k1, k2 = jax.random.split(key)
    x = jax.random.normal(k1, (2, 4, 16, 16), dtype=jnp.float32)
    x_odd = jax.random.normal(k2, (2, 4, 15, 15), dtype=jnp.float32)

    # 1) PP-HGNetV2 stem config: kernel_size=3, stride=2, padding='same'
    out = jax.block_until_ready(custom_max_pool2d(x, 3, 2, "same"))
    assert out.shape == (2, 4, 8, 8), out.shape
    assert np.allclose(np.asarray(out), _ref_max_pool(x, 3, 2, "same"),
                       atol=1e-6)

    # 2) numeric-padding branch (nn.MaxPool2d path)
    out = jax.block_until_ready(custom_max_pool2d(x, 3, 2, 1))
    assert out.shape == (2, 4, 8, 8), out.shape
    assert np.allclose(np.asarray(out), _ref_max_pool(x, 3, 2, 1), atol=1e-6)

    # 3) zero-padding fast path (no canvas scratch)
    out = jax.block_until_ready(custom_max_pool2d(x, 2, 2, 0))
    assert out.shape == (2, 4, 8, 8), out.shape
    assert np.allclose(np.asarray(out), _ref_max_pool(x, 2, 2, 0), atol=1e-6)

    # 4) ceil_mode with numeric padding (odd Ho -> per-image matmul fallback)
    out = jax.block_until_ready(custom_max_pool2d(x, 3, 2, 1, ceil_mode=True))
    assert out.shape == (2, 4, 9, 9), out.shape
    assert np.allclose(np.asarray(out),
                       _ref_max_pool(x, 3, 2, 1, ceil_mode=True), atol=1e-6)

    # 5) 'same' with odd spatial size (asymmetric, nonzero left/top padding)
    out = jax.block_until_ready(custom_max_pool2d(x_odd, 3, 2, "same"))
    assert out.shape == (2, 4, 8, 8), out.shape
    assert np.allclose(np.asarray(out), _ref_max_pool(x_odd, 3, 2, "same"),
                       atol=1e-6)

    print("KERNEL_OK")
</pallas_src>

<mosaic_0001>
module attributes {stable_mosaic.version = 11 : i64} {
  func.func @kernel(%arg0: i32, %arg1: memref<4x16x16xf32, #tpu.memory_space<vmem>>, %arg2: memref<15x8xf32, #tpu.memory_space<vmem>>, %arg3: memref<4x8x8xf32, #tpu.memory_space<vmem>>, %arg4: memref<4x17x17xf32, #tpu.memory_space<vmem>>) attributes {dimension_semantics = [#tpu.dimension_semantics<parallel>], iteration_bounds = array<i64: 2>, scalar_prefetch = 0 : i64, scratch_operands = 1 : i64, tpu.core_type = #tpu.core_type<tc>, window_params = [{transform_indices = @transform_0, window_bounds = array<i64: 4, 16, 16>}, {pipeline_mode = #tpu.pipeline_mode<synchronous>, transform_indices = @transform_1, window_bounds = array<i64: 15, 8>}, {transform_indices = @transform_2, window_bounds = array<i64: 4, 8, 8>}]} {
    %cst = arith.constant 0.000000e+00 : f32
    %0 = vector.broadcast %cst : f32 to vector<4x1x17xf32>
    %c0 = arith.constant 0 : index
    %c16 = arith.constant 16 : index
    %c0_0 = arith.constant 0 : index
    %1 = vector.load %arg4[%c0, %c16, %c0_0] : memref<4x17x17xf32, #tpu.memory_space<vmem>>, vector<4x1x17xf32>
    tpu.vector_store %arg4[%c0, %c16, %c0_0], %0 {strides = array<i32>} : memref<4x17x17xf32, #tpu.memory_space<vmem>>, vector<4x1x17xf32>,
    %cst_1 = arith.constant 0.000000e+00 : f32
    %2 = vector.broadcast %cst_1 : f32 to vector<4x16x1xf32>
    %c0_2 = arith.constant 0 : index
    %c0_3 = arith.constant 0 : index
    %c16_4 = arith.constant 16 : index
    %3 = vector.load %arg4[%c0_2, %c0_3, %c16_4] : memref<4x17x17xf32, #tpu.memory_space<vmem>>, vector<4x16x1xf32>
    tpu.vector_store %arg4[%c0_2, %c0_3, %c16_4], %2 {strides = array<i32>} : memref<4x17x17xf32, #tpu.memory_space<vmem>>, vector<4x16x1xf32>,
    %c0_5 = arith.constant 0 : index
    %c0_6 = arith.constant 0 : index
    %c0_7 = arith.constant 0 : index
    %4 = vector.load %arg1[%c0_5, %c0_6, %c0_7] : memref<4x16x16xf32, #tpu.memory_space<vmem>>, vector<4x16x16xf32>
    %c0_8 = arith.constant 0 : index
    %c0_9 = arith.constant 0 : index
    %c0_10 = arith.constant 0 : index
    %5 = vector.load %arg4[%c0_8, %c0_9, %c0_10] : memref<4x17x17xf32, #tpu.memory_space<vmem>>, vector<4x16x16xf32>
    tpu.vector_store %arg4[%c0_8, %c0_9, %c0_10], %4 {strides = array<i32>} : memref<4x17x17xf32, #tpu.memory_space<vmem>>, vector<4x16x16xf32>,
    %c0_11 = arith.constant 0 : index
    %c0_12 = arith.constant 0 : index
    %c0_13 = arith.constant 0 : index
    %6 = tpu.strided_load %arg4[%c0_11, %c0_12, %c0_13] {strides = array<i32: 1, 2, 1>} : memref<4x17x17xf32, #tpu.memory_space<vmem>>, vector<4x8x17xf32>
    %c0_14 = arith.constant 0 : index
    %c1 = arith.constant 1 : index
    %c0_15 = arith.constant 0 : index
    %7 = tpu.strided_load %arg4[%c0_14, %c1, %c0_15] {strides = array<i32: 1, 2, 1>} : memref<4x17x17xf32, #tpu.memory_space<vmem>>, vector<4x8x17xf32>
    %8 = arith.maximumf %6, %7 : vector<4x8x17xf32>
    %c0_16 = arith.constant 0 : index
    %c2 = arith.constant 2 : index
    %c0_17 = arith.constant 0 : index
    %9 = tpu.strided_load %arg4[%c0_16, %c2, %c0_17] {strides = array<i32: 1, 2, 1>} : memref<4x17x17xf32, #tpu.memory_space<vmem>>, vector<4x8x17xf32>
    %10 = arith.maximumf %8, %9 : vector<4x8x17xf32>
    %11 = vector.extract_strided_slice %10 {offsets = [0, 0, 0], sizes = [4, 8, 15], strides = [1, 1, 1]} : vector<4x8x17xf32> to vector<4x8x15xf32>
    %12 = vector.extract_strided_slice %10 {offsets = [0, 0, 1], sizes = [4, 8, 15], strides = [1, 1, 1]} : vector<4x8x17xf32> to vector<4x8x15xf32>
    %13 = arith.maximumf %11, %12 : vector<4x8x15xf32>
    %14 = vector.extract_strided_slice %10 {offsets = [0, 0, 2], sizes = [4, 8, 15], strides = [1, 1, 1]} : vector<4x8x17xf32> to vector<4x8x15xf32>
    %15 = arith.maximumf %13, %14 : vector<4x8x15xf32>
    %c0_18 = arith.constant 0 : index
    %c0_19 = arith.constant 0 : index
    %16 = vector.load %arg2[%c0_18, %c0_19] : memref<15x8xf32, #tpu.memory_space<vmem>>, vector<15x8xf32>
    %17 = vector.shape_cast %15 : vector<4x8x15xf32> to vector<32x15xf32>
    %cst_20 = arith.constant dense<0.000000e+00> : vector<32x8xf32>
    %18 = tpu.matmul %17, %16, %cst_20 {dimension_numbers = #tpu.dot_dimension_numbers<[1], [0], [0], [1], [0, 0, 1, 1], [], []>} : vector<32x15xf32>, vector<15x8xf32>, vector<32x8xf32> -> vector<32x8xf32>
    %19 = vector.shape_cast %18 : vector<32x8xf32> to vector<4x8x8xf32>
    %c0_21 = arith.constant 0 : index
    %c0_22 = arith.constant 0 : index
    %c0_23 = arith.constant 0 : index
    %20 = vector.load %arg3[%c0_21, %c0_22, %c0_23] : memref<4x8x8xf32, #tpu.memory_space<vmem>>, vector<4x8x8xf32>
    tpu.vector_store %arg3[%c0_21, %c0_22, %c0_23], %19 {strides = array<i32>} : memref<4x8x8xf32, #tpu.memory_space<vmem>>, vector<4x8x8xf32>,
    return
  }
  func.func @transform_0(%arg0: i32) -> (i32, i32, i32) {
    %c0_i32 = arith.constant 0 : i32
    %c0_i32_0 = arith.constant 0 : i32
    %c0_i32_1 = arith.constant 0 : i32
    return %arg0, %c0_i32, %c0_i32_0 : i32, i32, i32
  }
  func.func @transform_1(%arg0: i32) -> (i32, i32) {
    %c0_i32 = arith.constant 0 : i32
    %c0_i32_0 = arith.constant 0 : i32
    %c0_i32_1 = arith.constant 0 : i32
    return %c0_i32, %c0_i32_0 : i32, i32
  }
  func.func @transform_2(%arg0: i32) -> (i32, i32, i32) {
    %c0_i32 = arith.constant 0 : i32
    %c0_i32_0 = arith.constant 0 : i32
    %c0_i32_1 = arith.constant 0 : i32
    return %arg0, %c0_i32, %c0_i32_0 : i32, i32, i32
  }
}

</mosaic_0001>

<llo_original>
// kernel: tpu_custom_call.1
$region0: #{tpu_custom_call.1}
  #allocation0 [shape = 'u32[]', space=smem, size = 0x4, offset = 0x4, fixed_abs, tag = 'smem constant byte address 0x4 - core index']
  #allocation1 [shape = 'u32[144,128]{1,0:T(1,128)}', space=vmem, size = 0x12000, scoped, tag = 'internal scratch']
  #allocation2 [shape = 'f32[4,17,17]{2,1,0:T(8,128)}', space=vmem, size = 0xc000, scoped, tag = 'scratch operand']
  %s0 = inlined_call_operand.hbm [shape: f32[8,16,16], index: 0, kind: input, shape index: {}]
  %s1 = inlined_call_operand.vmem [shape: f32[15,8], index: 1, kind: input, shape index: {}]
  %s2 = inlined_call_operand.hbm [shape: f32[8,8,8], index: 2, kind: output, shape index: {}]
  %s3 = sld [smem:[#allocation0]]
  $region45: #{tpu_custom_call.1} parent=0
    _
  %s5 = ssub.s32 1, %s3
  %s6 = scalar_select 0, %s5, %s3
  $region1: #{tpu_custom_call.1} parent=0
    #allocation3 [shape = 'u8[65536]{0}', space=vmem, size = 0x10000, scoped, tag = 'input window, operand 0']
    #allocation4 [shape = 's32[2]{0}', space=sflag, size = 0x8, scoped, tag = 'scoped memory for tpu_custom_call.1']
    #allocation5 [shape = 's32[2]{0}', space=sflag, size = 0x8, scoped, tag = 'scoped memory for tpu_custom_call.1']
    #allocation6 [shape = 'u8[32768]{0}', space=vmem, size = 0x8000, scoped, tag = 'output window, operand 0']
    %7 = vsyncpa [#allocation4], 0
    %s8 = scalar_lea.sflag [#allocation4], 1
    %9 = vsyncpa %s8, 0
    %10 = vsyncpa [#allocation5], 0
    %s11 = scalar_lea.sflag [#allocation5], 1
    %12 = vsyncpa %s11, 0
    loop: start=0, step=1, limit=4
    $region2: #{tpu_custom_call.1} parent=1 // loop_pre_header
      _
    $region3: #{tpu_custom_call.1} parent=1 // loop_header
      %s14 = sphi 0, %s18
      %p15 = scmp.ge.s32.totalorder %s14, 4
      %s24 = sphi 0, %s26
      %s27 = sphi 0, %s24
      %s28 = sphi 0, %s27
      %s44 = sphi 0, %s28
      %s48 = sphi 0, %s48
      %s50 = sphi 0, %s48
      %s51 = sphi 0, %s50
      %s65 = sphi 0, %s51
      %s71 = sphi 0, %s73
      %s74 = sphi 0, %s71
      %s75 = sphi 0, %s74
      %s91 = sphi 0, %s75
    $region4: #{tpu_custom_call.1} parent=1 // loop_header_branch
      %17 = sbr.rel (%p15) target = $region8
    $region5: #{tpu_custom_call.1} parent=1 // loop_body
      %s19 = ssub.s32 %s14, 1
      %s20 = ssub.s32 %s14, 2
      %s21 = sadd.s32 %s14, 1
      %s22 = ssub.s32 %s14, %s21
      %p23 = scmp.eq.s32.totalorder %s22, 0
      %s25 = sadd.s32 %s24, 1
      %s26 = scalar_select %p23, %s24, %s25
      %p29 = pneg %p23
      %p30 = scmp.eq.s32.totalorder %s14, 1
      %p31 = por %p29, %p30
      %p32 = scmp.ne.s32.totalorder %s24, %s27
      %p33 = scmp.eq.s32.totalorder %s14, 0
      %p34 = por %p32, %p33
      %p35 = scmp.ne.s32.totalorder %s24, %s27
      %p36 = scmp.eq.s32.totalorder %s19, 1
      %p37 = por %p35, %p36
      %p38 = scmp.ne.s32.totalorder %s27, %s28
      %p39 = scmp.eq.s32.totalorder %s19, 0
      %p40 = por %p38, %p39
      %p41 = scmp.ne.s32.totalorder %s27, %s28
      %p42 = scmp.eq.s32.totalorder %s20, 1
      %p43 = por %p41, %p42
      %p45 = scmp.ne.s32.totalorder %s28, %s44
      %p46 = scmp.eq.s32.totalorder %s20, 0
      %p47 = por %p45, %p46
      %s49 = sadd.s32 %s48, 1
      %p52 = scmp.eq.s32.totalorder %s14, 1
      %p53 = scmp.ne.s32.totalorder %s48, %s50
      %p54 = scmp.eq.s32.totalorder %s14, 0
      %p55 = por %p53, %p54
      %p56 = scmp.ne.s32.totalorder %s48, %s50
      %p57 = scmp.eq.s32.totalorder %s19, 1
      %p58 = por %p56, %p57
      %p59 = scmp.ne.s32.totalorder %s50, %s51
      %p60 = scmp.eq.s32.totalorder %s19, 0
      %p61 = por %p59, %p60
      %p62 = scmp.ne.s32.totalorder %s50, %s51
      %p63 = scmp.eq.s32.totalorder %s20, 1
      %p64 = por %p62, %p63
      %p66 = scmp.ne.s32.totalorder %s51, %s65
      %p67 = scmp.eq.s32.totalorder %s20, 0
      %p68 = por %p66, %p67
      %s69 = ssub.s32 %s14, %s21
      %p70 = scmp.eq.s32.totalorder %s69, 0
      %s72 = sadd.s32 %s71, 1
      %s73 = scalar_select %p70, %s71, %s72
      %p76 = pneg %p70
      %p77 = scmp.eq.s32.totalorder %s14, 1
      %p78 = por %p76, %p77
      %p79 = scmp.ne.s32.totalorder %s71, %s74
      %p80 = scmp.eq.s32.totalorder %s14, 0
      %p81 = por %p79, %p80
      %p82 = scmp.ne.s32.totalorder %s71, %s74
      %p83 = scmp.eq.s32.totalorder %s19, 1
      %p84 = por %p82, %p83
      %p85 = scmp.ne.s32.totalorder %s74, %s75
      %p86 = scmp.eq.s32.totalorder %s19, 0
      %p87 = por %p85, %p86
      %p88 = scmp.ne.s32.totalorder %s74, %s75
      %p89 = scmp.eq.s32.totalorder %s20, 1
      %p90 = por %p88, %p89
      %p92 = scmp.ne.s32.totalorder %s75, %s91
      %p93 = scmp.eq.s32.totalorder %s20, 0
      %p94 = por %p92, %p93
      %p95 = scmp.le.s32.totalorder 1, %s14
      %p96 = scmp.lt.s32.totalorder %s14, 3
      %p97 = pnand %p95, %p96
      %p98 = pneg %p97
      // Predicated region
      $region9: #{tpu_custom_call.1} parent=5 // pred_check
        _
      $region10: #{tpu_custom_call.1} parent=5 // pred_check_branch
        %100 = sbr.rel (%p97) target = $region12
      $region11: #{tpu_custom_call.1} parent=5 // pred_region
        %s101 = ssub.s32 %s14, 1
        // Predicated region
        $region13: #{tpu_custom_call.1} parent=11 // pred_check
          %p102 = pneg %p61
        $region14: #{tpu_custom_call.1} parent=11 // pred_check_branch
          %104 = sbr.rel (%p102) target = $region16
        $region15: #{tpu_custom_call.1} parent=11 // pred_region
          _
        $region16: #{tpu_custom_call.1} parent=11 // pred_fallthru
          _
      $region12: #{tpu_custom_call.1} parent=5 // pred_fallthru
        _
      %p105 = scmp.lt.s32.totalorder %s14, 2
      // Predicated region
      $region17: #{tpu_custom_call.1} parent=5 // pred_check
        %p106 = pneg %p105
      $region18: #{tpu_custom_call.1} parent=5 // pred_check_branch
        %108 = sbr.rel (%p106) target = $region20
      $region19: #{tpu_custom_call.1} parent=5 // pred_region
        // Predicated region
        $region21: #{tpu_custom_call.1} parent=19 // pred_check
          %p109 = pneg %p34
        $region22: #{tpu_custom_call.1} parent=19 // pred_check_branch
          %111 = sbr.rel (%p109) target = $region24
        $region23: #{tpu_custom_call.1} parent=19 // pred_region
          %s112 = sand.u32 %s24, 1
          %s113 = scalar_lea.sflag [#allocation4], %s112
          %s114 = sand.u32 %s24, 1
          %s115 = smul.addr %s114, 64
          %s116 = scalar_lea.vmem [#allocation3], %s115
          %s117 = smul.u32 4, %s14
          %s119 = ssub.s32 1024, 1024
          %120 = vsyncadd %s113, %s119
          %s121 = smul.addr %s117, 2
          %s122 = smul.addr %s121, 128
          %s123 = scalar_lea.hbm %s0, %s122
          %s124 = sshll.u32 %s116, 4
          %s125 = int_to_ptr.vmem [resolvable:$true] %s124
          %130 = dma.hbm_to_vmem [thread:$0]  %s123, 1024, %s125, %s113, 128, 128, 8
        $region24: #{tpu_custom_call.1} parent=19 // pred_fallthru
          _
      $region20: #{tpu_custom_call.1} parent=5 // pred_fallthru
        _
      %p131 = scmp.le.s32.totalorder 1, %s14
      %p132 = scmp.lt.s32.totalorder %s14, 3
      %p133 = pnand %p131, %p132
      %p134 = pneg %p133
      // Predicated region
      $region25: #{tpu_custom_call.1} parent=5 // pred_check
        _
      $region26: #{tpu_custom_call.1} parent=5 // pred_check_branch
        %136 = sbr.rel (%p133) target = $region28
      $region27: #{tpu_custom_call.1} parent=5 // pred_region
        %s137 = ssub.s32 %s14, 1
        %s138 = sand.u32 %s27, 1
        %s139 = scalar_lea.sflag [#allocation4], %s138
        %s140 = sand.u32 %s27, 1
        %s141 = smul.addr %s140, 64
        %s142 = scalar_lea.vmem [#allocation3], %s141
        // Predicated region
        $region29: #{tpu_custom_call.1} parent=27 // pred_check
          %p143 = pneg %p40
        $region30: #{tpu_custom_call.1} parent=27 // pred_check_branch
          %145 = sbr.rel (%p143) target = $region32
        $region31: #{tpu_custom_call.1} parent=27 // pred_region
          %146 = dma.done %s139, 1024
        $region32: #{tpu_custom_call.1} parent=27 // pred_fallthru
          _
        %s147 = sand.u32 %s27, 1
        %s148 = scalar_lea.sflag [#allocation4], %s147
        %s149 = sand.u32 %s27, 1
        %s150 = smul.addr %s149, 64
        %s151 = scalar_lea.vmem [#allocation3], %s150
        %p152 = pneg %p40
        %p153 = pneg %p37
        %p154 = pneg %p61
        %p155 = pneg %p58
        %p156 = pneg %p87
        %p157 = pneg %p84
        %s158 = sand.u32 %s74, 1
        %s159 = scalar_lea.sflag [#allocation5], %s158
        %s160 = sand.u32 %s74, 1
        %s161 = smul.addr %s160, 32
        %s162 = scalar_lea.vmem [#allocation6], %s161
        %s163 = smul.u32 4, %s19
        %s164 = smul.u32 4, %s19
        %vm165 = vcmask 131072
        %166 = vst.msk [vmem:[#allocation2 + $0x10] sm:$0x1] %vm165, 0.0
        %167 = vst.msk [vmem:[#allocation2 + $0x28] sm:$0x1] %vm165, 0.0
        %168 = vst.msk [vmem:[#allocation2 + $0x40] sm:$0x1] %vm165, 0.0
        %169 = vst.msk [vmem:[#allocation2 + $0x58] sm:$0x1] %vm165, 0.0
        %vm170 = vcmask 138368
        %171 = vst.msk [vmem:[#allocation2] sm:$0xff] %vm170, 0.0
        %172 = vst.msk [vmem:[#allocation2 + $0x8] sm:$0xff] %vm170, 0.0
        %173 = vst.msk [vmem:[#allocation2 + $0x18] sm:$0xff] %vm170, 0.0
        %174 = vst.msk [vmem:[#allocation2 + $0x20] sm:$0xff] %vm170, 0.0
        %175 = vst.msk [vmem:[#allocation2 + $0x30] sm:$0xff] %vm170, 0.0
        %176 = vst.msk [vmem:[#allocation2 + $0x38] sm:$0xff] %vm170, 0.0
        %177 = vst.msk [vmem:[#allocation2 + $0x48] sm:$0xff] %vm170, 0.0
        %178 = vst.msk [vmem:[#allocation2 + $0x50] sm:$0xff] %vm170, 0.0
        %v179 = vld [vmem:[%s142] sm:$0xff]
        %v180 = vld [vmem:[%s142 + $0x8] sm:$0xff]
        %v181 = vld [vmem:[%s142 + $0x10] sm:$0xff]
        %v182 = vld [vmem:[%s142 + $0x18] sm:$0xff]
        %v183 = vld [vmem:[%s142 + $0x20] sm:$0xff]
        %v184 = vld [vmem:[%s142 + $0x28] sm:$0xff]
        %v185 = vld [vmem:[%s142 + $0x30] sm:$0xff]
        %v186 = vld [vmem:[%s142 + $0x38] sm:$0xff]
        %vm187 = vcmask 130048
        %188 = vst.msk [vmem:[#allocation2] sm:$0xff] %vm187, %v179
        %189 = vst.msk [vmem:[#allocation2 + $0x8] sm:$0xff] %vm187, %v180
        %190 = vst.msk [vmem:[#allocation2 + $0x18] sm:$0xff] %vm187, %v181
        %191 = vst.msk [vmem:[#allocation2 + $0x20] sm:$0xff] %vm187, %v182
        %192 = vst.msk [vmem:[#allocation2 + $0x30] sm:$0xff] %vm187, %v183
        %193 = vst.msk [vmem:[#allocation2 + $0x38] sm:$0xff] %vm187, %v184
        %194 = vst.msk [vmem:[#allocation2 + $0x48] sm:$0xff] %vm187, %v185
        %195 = vst.msk [vmem:[#allocation2 + $0x50] sm:$0xff] %vm187, %v186
        %v196 = vld [vmem:[#allocation2] ss:$2 sm:$0xff]
        %s197 = scalar_lea.vmem [#allocation2], 24
        %v198 = vld [vmem:[%s197] ss:$2 sm:$0xff]
        %s199 = scalar_lea.vmem [#allocation2], 48
        %v200 = vld [vmem:[%s199] ss:$2 sm:$0xff]
        %s201 = scalar_lea.vmem [#allocation2], 72
        %v202 = vld [vmem:[%s201] ss:$2 sm:$0xff]
        %s203 = scalar_lea.vmem [#allocation2], 1
        %v204 = vld [vmem:[%s203] ss:$2 sm:$0xff]
        %s205 = scalar_lea.vmem [#allocation2], 25
        %v206 = vld [vmem:[%s205] ss:$2 sm:$0xff]
        %s207 = scalar_lea.vmem [#allocation2], 49
        %v208 = vld [vmem:[%s207] ss:$2 sm:$0xff]
        %s209 = scalar_lea.vmem [#allocation2], 73
        %v210 = vld [vmem:[%s209] ss:$2 sm:$0xff]
        %v211 = vmax.f32 %v196, %v204
        %v212 = vmax.f32 %v198, %v206
        %v213 = vmax.f32 %v200, %v208
        %v214 = vmax.f32 %v202, %v210
        %s215 = scalar_lea.vmem [#allocation2], 2
        %v216 = vld [vmem:[%s215] ss:$2 sm:$0xff]
        %s217 = scalar_lea.vmem [#allocation2], 26
        %v218 = vld [vmem:[%s217] ss:$2 sm:$0xff]
        %s219 = scalar_lea.vmem [#allocation2], 50
        %v220 = vld [vmem:[%s219] ss:$2 sm:$0xff]
        %s221 = scalar_lea.vmem [#allocation2], 74
        %v222 = vld [vmem:[%s221] ss:$2 sm:$0xff]
        %v223 = vmax.f32 %v211, %v216
        %v224 = vmax.f32 %v212, %v218
        %v225 = vmax.f32 %v213, %v220
        %v226 = vmax.f32 %v214, %v222
        %231 = vrot.lane.b32.xlu0 %v223, 127
        %v232 = vpop.permute.xlu0 %231
        %233 = vrot.lane.b32.xlu0 %v224, 127
        %v234 = vpop.permute.xlu0 %233
        %235 = vrot.lane.b32.xlu0 %v225, 127
        %v236 = vpop.permute.xlu0 %235
        %237 = vrot.lane.b32.xlu0 %v226, 127
        %v238 = vpop.permute.xlu0 %237
        %v243 = vmax.f32 %v223, %v232
        %v244 = vmax.f32 %v224, %v234
        %v245 = vmax.f32 %v225, %v236
        %v246 = vmax.f32 %v226, %v238
        %247 = vrot.lane.b32.xlu0 %v223, 126
        %v248 = vpop.permute.xlu0 %247
        %249 = vrot.lane.b32.xlu0 %v224, 126
        %v250 = vpop.permute.xlu0 %249
        %251 = vrot.lane.b32.xlu0 %v225, 126
        %v252 = vpop.permute.xlu0 %251
        %253 = vrot.lane.b32.xlu0 %v226, 126
        %v254 = vpop.permute.xlu0 %253
        %v259 = vmax.f32 %v243, %v248
        %v260 = vmax.f32 %v244, %v250
        %v261 = vmax.f32 %v245, %v252
        %v262 = vmax.f32 %v246, %v254
        %v263 = vld [vmem:[%s1] sm:$0xff]
        %v264 = vld [vmem:[%s1 + $0x8] sm:$0x7f]
        %vm265 = vcmask 121856
        %v267 = vsel %vm265, %v259, 0
        %v270 = vsel %vm265, %v260, 0
        %v273 = vsel %vm265, %v261, 0
        %v276 = vsel %vm265, %v262, 0
        %vm278 = vcmask 1046528
        %v280 = vsel %vm278, %v264, 0
        %282 = vmatprep.subr.mxu0 0.0
        %283 = vmatpush1.msra.mxu0 %v263
        %284 = vmatprep.subr.mxu0 0.0
        %285 = vmatpush1.msra.mxu0 %v280
        %286 = vmatprep.subr.mxu0 0.0
        %287 = vmatpush1.msra.mxu0 0.0
        %288 = vmatprep.subr.mxu0 0.0
        %289 = vmatpush1.msra.mxu0 0.0
        %290 = vmatprep.subr.mxu0 0.0
        %291 = vmatpush1.msra.mxu0 0.0
        %292 = vmatprep.subr.mxu0 0.0
        %293 = vmatpush1.msra.mxu0 0.0
        %294 = vmatprep.subr.mxu0 0.0
        %295 = vmatpush1.msra.mxu0 0.0
        %296 = vmatprep.subr.mxu0 0.0
        %297 = vmatpush1.msra.mxu0 0.0
        %298 = vmatprep.subr.mxu0 0.0
        %299 = vmatpush1.msra.mxu0 0.0
        %300 = vmatprep.subr.mxu0 0.0
        %301 = vmatpush1.msra.mxu0 0.0
        %302 = vmatprep.subr.mxu0 0.0
        %303 = vmatpush1.msra.mxu0 0.0
        %304 = vmatprep.subr.mxu0 0.0
        %305 = vmatpush1.msra.mxu0 0.0
        %306 = vmatprep.subr.mxu0 0.0
        %307 = vmatpush1.msra.mxu0 0.0
        %308 = vmatprep.subr.mxu0 0.0
        %309 = vmatpush1.msra.mxu0 0.0
        %310 = vmatprep.subr.mxu0 0.0
        %311 = vmatpush1.msra.mxu0 0.0
        %312 = vmatprep.subr.mxu0 0.0
        %313 = vmatpush1.msra.mxu0 0.0
        %314 = vmatprep.subr.mxu0 0.0
        %315 = vmatpush1.msra.mxu0 0.0
        %316 = vmatprep.subr.mxu0 0.0
        %317 = vmatpush1.msra.mxu0 0.0
        %318 = vmatprep.subr.mxu0 0.0
        %319 = vmatpush1.msra.mxu0 0.0
        %320 = vmatprep.subr.mxu0 0.0
        %321 = vmatpush1.msra.mxu0 0.0
        %322 = vmatprep.subr.mxu0 0.0
        %323 = vmatpush1.msra.mxu0 0.0
        %324 = vmatprep.subr.mxu0 0.0
        %325 = vmatpush1.msra.mxu0 0.0
        %326 = vmatprep.subr.mxu0 0.0
        %327 = vmatpush1.msra.mxu0 0.0
        %328 = vmatprep.subr.mxu0 0.0
        %329 = vmatpush1.msra.mxu0 0.0
        %330 = vmatprep.subr.mxu0 0.0
        %331 = vmatpush1.msra.mxu0 0.0
        %332 = vmatprep.subr.mxu0 0.0
        %333 = vmatpush1.msra.mxu0 0.0
        %334 = vmatprep.subr.mxu0 0.0
        %335 = vmatpush1.msra.mxu0 0.0
        %336 = vmatprep.subr.mxu0 0.0
        %337 = vmatpush1.msra.mxu0 0.0
        %338 = vmatprep.subr.mxu0 0.0
        %339 = vmatpush1.msra.mxu0 0.0
        %340 = vmatprep.subr.mxu0 0.0
        %341 = vmatpush1.msra.mxu0 0.0
        %342 = vmatprep.subr.mxu0 0.0
        %343 = vmatpush1.msra.mxu0 0.0
        %344 = vmatprep.subr.mxu0 0.0
        %345 = vmatpush1.msra.mxu0 0.0
        %346 = vmatprep.mubr.f32.mxu0 0.0
        %347 = vmatmul.mubr.f32.gmra.mrb[0].mxu0 %v267
        %v348 = vpop.f32.mrb[0].mxu0
        %v349 = vadd.f32 0.0, %v348
        %v350 = vpop.f32.mrb[0].mxu0
        %351 = vmatprep.mubr.f32.mxu0 0.0
        %352 = vmatmul.mubr.f32.gmra.mrb[0].mxu0 %v270
        %v353 = vpop.f32.mrb[0].mxu0
        %v354 = vadd.f32 0.0, %v353
        %v355 = vpop.f32.mrb[0].mxu0
        %356 = vmatprep.mubr.f32.mxu0 0.0
        %357 = vmatmul.mubr.f32.gmra.mrb[0].mxu0 %v273
        %v358 = vpop.f32.mrb[0].mxu0
        %v359 = vadd.f32 0.0, %v358
        %v360 = vpop.f32.mrb[0].mxu0
        %361 = vmatprep.mubr.f32.mxu0 0.0
        %362 = vmatmul.mubr.f32.gmra.mrb[0].mxu0 %v276
        %v363 = vpop.f32.mrb[0].mxu0
        %v364 = vadd.f32 0.0, %v363
        %v365 = vpop.f32.mrb[0].mxu0
        %366 = vdwg.mxu0
        %vm367 = vcmask 64512
        %368 = vst.msk [vmem:[%s162] sm:$0xff] %vm367, %v349
        %369 = vst.msk [vmem:[%s162 + $0x8] sm:$0xff] %vm367, %v354
        %370 = vst.msk [vmem:[%s162 + $0x10] sm:$0xff] %vm367, %v359
        %371 = vst.msk [vmem:[%s162 + $0x18] sm:$0xff] %vm367, %v364
        %s372 = sand.u32 %s74, 1
        %s373 = scalar_lea.sflag [#allocation5], %s372
        %s374 = sand.u32 %s74, 1
        %s375 = smul.addr %s374, 32
        %s376 = scalar_lea.vmem [#allocation6], %s375
        // Predicated region
        $region33: #{tpu_custom_call.1} parent=27 // pred_check
          %p377 = pneg %p84
        $region34: #{tpu_custom_call.1} parent=27 // pred_check_branch
          %379 = sbr.rel (%p377) target = $region36
        $region35: #{tpu_custom_call.1} parent=27 // pred_region
          %s380 = smul.u32 4, %s19
          %s382 = ssub.s32 512, 512
          %383 = vsyncadd %s373, %s382
          %s384 = smul.addr %s380, 128
          %s385 = scalar_lea.hbm %s2, %s384
          %s386 = sshll.u32 %s376, 4
          %s387 = int_to_ptr.vmem [resolvable:$true] %s386
          %392 = dma.vmem_to_hbm [thread:$0]  %s387, 512, %s385, %s373, 128, 128, 8
        $region36: #{tpu_custom_call.1} parent=27 // pred_fallthru
          _
      $region28: #{tpu_custom_call.1} parent=5 // pred_fallthru
        _
      %p393 = scmp.le.s32.totalorder 2, %s14
      // Predicated region
      $region37: #{tpu_custom_call.1} parent=5 // pred_check
        %p394 = pneg %p393
      $region38: #{tpu_custom_call.1} parent=5 // pred_check_branch
        %396 = sbr.rel (%p394) target = $region40
      $region39: #{tpu_custom_call.1} parent=5 // pred_region
        %s397 = ssub.s32 %s14, 2
        // Predicated region
        $region41: #{tpu_custom_call.1} parent=39 // pred_check
          %p398 = pneg %p90
        $region42: #{tpu_custom_call.1} parent=39 // pred_check_branch
          %400 = sbr.rel (%p398) target = $region44
        $region43: #{tpu_custom_call.1} parent=39 // pred_region
          %s401 = sand.u32 %s75, 1
          %s402 = scalar_lea.sflag [#allocation5], %s401
          %s403 = sand.u32 %s75, 1
          %s404 = smul.addr %s403, 32
          %s405 = scalar_lea.vmem [#allocation6], %s404
          %406 = dma.done %s402, 512
        $region44: #{tpu_custom_call.1} parent=39 // pred_fallthru
          _
      $region40: #{tpu_custom_call.1} parent=5 // pred_fallthru
        _
    $region6: #{tpu_custom_call.1} parent=1 // loop_footer
      %s18 = sadd.s32 1, %s14
    $region7: #{tpu_custom_call.1} parent=1 // loop_footer_branch
      %13 = sbr.rel target = $region3
    $region8: #{tpu_custom_call.1} parent=1 // loop_exit
      _
    %407 = vsyncpa [#allocation4], 1
    %s408 = scalar_lea.sflag [#allocation4], 1
    %409 = vsyncpa %s408, 1
    %410 = vsyncpa [#allocation5], 1
    %s411 = scalar_lea.sflag [#allocation5], 1
    %412 = vsyncpa %s411, 1

</llo_original>
